<compile_context>
chip_gen: v7x
topology: tpu7x:2x2x1
jax: 0.10.0
libtpu: 0.0.40
codegen_flags: <defaults>
</compile_context>

<pallas_src>
import functools

import jax
import jax.numpy as jnp
from jax.experimental import pallas as pl
from jax.experimental.pallas import tpu as pltpu


def _layernorm_kernel(x_ref, g_ref, b_ref, o_ref, *, eps, inv_n, f_valid, f_pad):
    # x_ref/o_ref: (Bt, F_pad) rows; g_ref/b_ref: (1, F_pad).
    # NOTE: the ragged last batch block may contain stale/padded rows; their
    # statistics are computed and then dropped by the masked writeback.  This
    # is harmless on TPU (no FP traps) -- do not "fix" it.
    x = x_ref[...].astype(jnp.float32)

    # Pass 1: mean (zero-padded feature columns contribute nothing to the sum;
    # inv_n = 1/F_true keeps the mean exact).
    mean = jnp.sum(x, axis=-1, keepdims=True) * inv_n

    # Pass 2: variance of centered values (numerically stable two-pass form).
    centered = x - mean
    if f_valid != f_pad:
        # Exclude the zero-padded columns (they became -mean after centering).
        col = jax.lax.broadcasted_iota(jnp.int32, centered.shape, 1)
        cm = jnp.where(col < f_valid, centered, 0.0)
    else:
        cm = centered
    var = jnp.sum(cm * cm, axis=-1, keepdims=True) * inv_n
    inv = jax.lax.rsqrt(var + eps)

    g = g_ref[...].astype(jnp.float32)
    b = b_ref[...].astype(jnp.float32)
    o_ref[...] = (centered * inv * g + b).astype(o_ref.dtype)


def _vmem_limit_bytes():
    """Per-generation scoped VMEM limit derived from physical capacity."""
    try:
        cap = int(pltpu.get_tpu_info().vmem_capacity_bytes)
    except Exception:  # conservative fallback (v7x-sized)
        cap = 64 * 1024 * 1024
    # ~3/4 of physical VMEM, capped at 100 MiB:
    #   v5e/v6e (128 MiB physical) -> 96 MiB;  v7x (64 MiB/TC) -> 48 MiB.
    return min((cap * 3) // 4, 100 * 1024 * 1024)


def _pick_batch_tile(B, F, itemsize, vmem_limit_bytes, min_steps=8):
    """Batch rows per grid step.

    Per-row VMEM footprint (bytes):
      * input  block, double-buffered : 2 * F * itemsize
      * output block, double-buffered : 2 * F * itemsize
      * in-kernel f32 temporaries     : ~3 * F * 4 (x_f32, centered, pre-cast out)
    Pick the largest Bt under ~60% of the VMEM limit (headroom for gamma/beta
    and compiler scratch), then shrink so the grid has >= min_steps steps
    (pipelining; even sharding across v7x's two TensorCores), sublane-aligned.
    """
    sublane = max(8, 32 // max(1, itemsize))   # f32: 8, bf16: 16, int8/fp8: 32
    if B <= sublane:
        return B                               # block == full array dim is legal

    bytes_per_row = 4 * F * itemsize + 12 * F
    budget = int(0.6 * vmem_limit_bytes)
    cap = max(sublane, (budget // bytes_per_row) // sublane * sublane)
    # TODO(synk): if even `sublane` rows overflow the budget (huge F), tile the
    # feature dim with a second "arbitrary" grid axis instead of shrinking Bt.

    target = pl.cdiv(B, min_steps)             # aim for >= min_steps grid steps
    bt = min(cap, max(sublane, (target // sublane) * sublane))
    return bt


def layer_norm_magnet(x, weight, bias, idx, eps=1e-5):
    """x: (B, N, D); weight/bias: (N, K, D); idx: static Python int selecting K."""
    B, N, D = x.shape
    F = N * D

    # Glue: slice the idx column of the 3-D params and flatten so the kernel
    # sees a lane-dense (..., F) last dimension.
    # TODO(synk): support a traced idx via PrefetchScalarGridSpec(num_scalar_prefetch=1).
    x2 = x.reshape(B, F)
    gamma = weight[:, idx, :].reshape(1, F)
    beta = bias[:, idx, :].reshape(1, F)

    # Pad the feature dim to a multiple of 128 (lane-dense, unmasked stores).
    # Zero pad columns leave the row sums unchanged; the kernel masks them out
    # of the variance and they are sliced off after the call.
    F_pad = ((F + 127) // 128) * 128
    if F_pad != F:
        pad = F_pad - F
        x2 = jnp.pad(x2, ((0, 0), (0, pad)))
        gamma = jnp.pad(gamma, ((0, 0), (0, pad)))
        beta = jnp.pad(beta, ((0, 0), (0, pad)))

    vmem_limit = _vmem_limit_bytes()
    Bt = _pick_batch_tile(B, F_pad, x.dtype.itemsize, vmem_limit)
    grid = (pl.cdiv(B, Bt),)   # ragged last block: rows are independent, so
                               # padded rows are computed then dropped on store.

    kernel = functools.partial(
        _layernorm_kernel, eps=float(eps), inv_n=1.0 / F, f_valid=F, f_pad=F_pad
    )
    out = pl.pallas_call(
        kernel,
        out_shape=jax.ShapeDtypeStruct((B, F_pad), x.dtype),
        grid_spec=pltpu.PrefetchScalarGridSpec(
            num_scalar_prefetch=0,
            grid=grid,
            in_specs=[
                pl.BlockSpec((Bt, F_pad), lambda i: (i, 0)),
                pl.BlockSpec((1, F_pad), lambda i: (0, 0)),
                pl.BlockSpec((1, F_pad), lambda i: (0, 0)),
            ],
            out_specs=pl.BlockSpec((Bt, F_pad), lambda i: (i, 0)),
        ),
        compiler_params=pltpu.CompilerParams(
            dimension_semantics=("parallel",),   # megacore-shards batch on v7x
            vmem_limit_bytes=int(vmem_limit),
        ),
    )(x2, gamma, beta)

    if F_pad != F:
        out = out[:, :F]
    return out.reshape(B, N, D)


if __name__ == "__main__":
    # Small shapes consistent with the module: normalized_shape = (N, K, D)
    B, N, K, D = 2, 8, 4, 32
    eps = 1e-5
    idx = 1

    key = jax.random.PRNGKey(0)
    kx, kw, kb = jax.random.split(key, 3)
    x = jax.random.normal(kx, (B, N, D), dtype=jnp.float32)

    # Deterministic param init (module uses ones/zeros; perturb slightly so
    # the affine path is actually exercised, still deterministic).
    weight = jnp.ones((N, K, D), dtype=jnp.float32) + 0.1 * jax.random.normal(
        kw, (N, K, D), dtype=jnp.float32
    )
    bias = jnp.zeros((N, K, D), dtype=jnp.float32) + 0.1 * jax.random.normal(
        kb, (N, K, D), dtype=jnp.float32
    )

    out = layer_norm_magnet(x, weight, bias, idx, eps=eps)
    out = jax.block_until_ready(out)

    # Pure-JAX reference check (per-sample LN over all non-batch dims).
    xf = x.astype(jnp.float32)
    mean = jnp.mean(xf, axis=(1, 2), keepdims=True)
    var = jnp.mean((xf - mean) ** 2, axis=(1, 2), keepdims=True)
    ref = (xf - mean) * jax.lax.rsqrt(var + eps) * weight[None, :, idx, :] + bias[
        None, :, idx, :
    ]
    assert jnp.allclose(out, ref, atol=1e-5, rtol=1e-5), "mismatch vs reference"

    print("KERNEL_OK")
</pallas_src>

<mosaic_0001>
module attributes {stable_mosaic.version = 11 : i64} {
  func.func @_layernorm_kernel(%arg0: i32, %arg1: memref<2x256xf32, #tpu.memory_space<vmem>>, %arg2: memref<1x256xf32, #tpu.memory_space<vmem>>, %arg3: memref<1x256xf32, #tpu.memory_space<vmem>>, %arg4: memref<2x256xf32, #tpu.memory_space<vmem>>) attributes {dimension_semantics = [#tpu.dimension_semantics<parallel>], iteration_bounds = array<i64: 1>, scalar_prefetch = 0 : i64, scratch_operands = 0 : i64, tpu.core_type = #tpu.core_type<tc>, window_params = [{transform_indices = @transform_0, window_bounds = array<i64: 2, 256>}, {pipeline_mode = #tpu.pipeline_mode<synchronous>, transform_indices = @transform_1, window_bounds = array<i64: 1, 256>}, {pipeline_mode = #tpu.pipeline_mode<synchronous>, transform_indices = @transform_2, window_bounds = array<i64: 1, 256>}, {transform_indices = @transform_3, window_bounds = array<i64: 2, 256>}]} {
    %c0 = arith.constant 0 : index
    %c0_0 = arith.constant 0 : index
    %0 = vector.load %arg1[%c0, %c0_0] : memref<2x256xf32, #tpu.memory_space<vmem>>, vector<2x256xf32>
    %cst = arith.constant dense<0.000000e+00> : vector<2xf32>
    %1 = vector.multi_reduction <add>, %0, %cst [1] : vector<2x256xf32> to vector<2xf32>
    %2 = vector.shape_cast %1 : vector<2xf32> to vector<2x1xf32>
    %cst_1 = arith.constant 3.906250e-03 : f32
    %3 = vector.broadcast %cst_1 : f32 to vector<2x1xf32>
    %4 = arith.mulf %2, %3 : vector<2x1xf32>
    %5 = vector.broadcast %4 : vector<2x1xf32> to vector<2x256xf32>
    %6 = arith.subf %0, %5 : vector<2x256xf32>
    %7 = arith.mulf %6, %6 : vector<2x256xf32>
    %cst_2 = arith.constant dense<0.000000e+00> : vector<2xf32>
    %8 = vector.multi_reduction <add>, %7, %cst_2 [1] : vector<2x256xf32> to vector<2xf32>
    %9 = vector.shape_cast %8 : vector<2xf32> to vector<2x1xf32>
    %cst_3 = arith.constant 3.906250e-03 : f32
    %10 = vector.broadcast %cst_3 : f32 to vector<2x1xf32>
    %11 = arith.mulf %9, %10 : vector<2x1xf32>
    %cst_4 = arith.constant 9.99999974E-6 : f32
    %12 = vector.broadcast %cst_4 : f32 to vector<2x1xf32>
    %13 = arith.addf %11, %12 : vector<2x1xf32>
    %14 = math.rsqrt %13 : vector<2x1xf32>
    %c0_5 = arith.constant 0 : index
    %c0_6 = arith.constant 0 : index
    %15 = vector.load %arg2[%c0_5, %c0_6] : memref<1x256xf32, #tpu.memory_space<vmem>>, vector<1x256xf32>
    %c0_7 = arith.constant 0 : index
    %c0_8 = arith.constant 0 : index
    %16 = vector.load %arg3[%c0_7, %c0_8] : memref<1x256xf32, #tpu.memory_space<vmem>>, vector<1x256xf32>
    %17 = vector.broadcast %14 : vector<2x1xf32> to vector<2x256xf32>
    %18 = arith.mulf %6, %17 : vector<2x256xf32>
    %19 = vector.broadcast %15 : vector<1x256xf32> to vector<2x256xf32>
    %20 = arith.mulf %18, %19 : vector<2x256xf32>
    %21 = vector.broadcast %16 : vector<1x256xf32> to vector<2x256xf32>
    %22 = arith.addf %20, %21 : vector<2x256xf32>
    %c0_9 = arith.constant 0 : index
    %c0_10 = arith.constant 0 : index
    %23 = vector.load %arg4[%c0_9, %c0_10] : memref<2x256xf32, #tpu.memory_space<vmem>>, vector<2x256xf32>
    tpu.vector_store %arg4[%c0_9, %c0_10], %22 {strides = array<i32>} : memref<2x256xf32, #tpu.memory_space<vmem>>, vector<2x256xf32>,
    return
  }
  func.func @transform_0(%arg0: i32) -> (i32, i32) {
    %c0_i32 = arith.constant 0 : i32
    %c0_i32_0 = arith.constant 0 : i32
    return %arg0, %c0_i32 : i32, i32
  }
  func.func @transform_1(%arg0: i32) -> (i32, i32) {
    %c0_i32 = arith.constant 0 : i32
    %c0_i32_0 = arith.constant 0 : i32
    %c0_i32_1 = arith.constant 0 : i32
    return %c0_i32, %c0_i32_0 : i32, i32
  }
  func.func @transform_2(%arg0: i32) -> (i32, i32) {
    %c0_i32 = arith.constant 0 : i32
    %c0_i32_0 = arith.constant 0 : i32
    %c0_i32_1 = arith.constant 0 : i32
    return %c0_i32, %c0_i32_0 : i32, i32
  }
  func.func @transform_3(%arg0: i32) -> (i32, i32) {
    %c0_i32 = arith.constant 0 : i32
    %c0_i32_0 = arith.constant 0 : i32
    return %arg0, %c0_i32 : i32, i32
  }
}

</mosaic_0001>

<llo_original>
// kernel: tpu_custom_call.1
$region0: #{tpu_custom_call.1}
  #allocation0 [shape = 'u32[]', space=smem, size = 0x4, offset = 0x4, fixed_abs, tag = 'smem constant byte address 0x4 - core index']
  #allocation1 [shape = 'u32[144,128]{1,0:T(1,128)}', space=vmem, size = 0x12000, scoped, tag = 'internal scratch']
  %s0 = inlined_call_operand.hbm [shape: f32[2,256], index: 0, kind: input, shape index: {}]
  %s1 = inlined_call_operand.vmem [shape: f32[1,256], index: 1, kind: input, shape index: {}]
  %s2 = inlined_call_operand.vmem [shape: f32[1,256], index: 2, kind: input, shape index: {}]
  %s3 = inlined_call_operand.hbm [shape: f32[2,256], index: 3, kind: output, shape index: {}]
  %s4 = sld [smem:[#allocation0]]
  $region26: #{tpu_custom_call.1} parent=0
    _
  %s6 = ssub.s32 1, %s4
  %s7 = scalar_select 0, %s6, %s4
  $region1: #{tpu_custom_call.1} parent=0
    #allocation2 [shape = 'u8[2048]{0}', space=vmem, size = 0x800, scoped, tag = 'input window, operand 0, single buffered']
    #allocation3 [shape = 's32[1]{0}', space=sflag, size = 0x4, scoped, tag = 'scoped memory for tpu_custom_call.1']
    #allocation4 [shape = 's32[1]{0}', space=sflag, size = 0x4, scoped, tag = 'scoped memory for tpu_custom_call.1']
    #allocation5 [shape = 'u8[2048]{0}', space=vmem, size = 0x800, scoped, tag = 'output window, operand 0, single buffered']
    %8 = vsyncpa [#allocation3], 0
    %9 = vsyncpa [#allocation4], 0
    // Predicated region
    $region2: #{tpu_custom_call.1} parent=1 // pred_check
      _
    $region3: #{tpu_custom_call.1} parent=1 // pred_check_branch
      %11 = sbr.rel (0) target = $region5
    $region4: #{tpu_custom_call.1} parent=1 // pred_region
      %s13 = ssub.s32 64, 64
      %14 = vsyncadd [#allocation3], %s13
      %s16 = sshll.u32 [#allocation2], 4
      %s17 = int_to_ptr.vmem [resolvable:$true] %s16
      %19 = dma.hbm_to_vmem [thread:$0]  %s0, 64, %s17, [#allocation3]
    $region5: #{tpu_custom_call.1} parent=1 // pred_fallthru
      _
    // Predicated region
    $region6: #{tpu_custom_call.1} parent=1 // pred_check
      _
    $region7: #{tpu_custom_call.1} parent=1 // pred_check_branch
      %21 = sbr.rel (0) target = $region9
    $region8: #{tpu_custom_call.1} parent=1 // pred_region
      _
    $region9: #{tpu_custom_call.1} parent=1 // pred_fallthru
      _
    // Predicated region
    $region10: #{tpu_custom_call.1} parent=1 // pred_check
      _
    $region11: #{tpu_custom_call.1} parent=1 // pred_check_branch
      %23 = sbr.rel (0) target = $region13
    $region12: #{tpu_custom_call.1} parent=1 // pred_region
      _
    $region13: #{tpu_custom_call.1} parent=1 // pred_fallthru
      _
    // Predicated region
    $region14: #{tpu_custom_call.1} parent=1 // pred_check
      _
    $region15: #{tpu_custom_call.1} parent=1 // pred_check_branch
      %25 = sbr.rel (0) target = $region17
    $region16: #{tpu_custom_call.1} parent=1 // pred_region
      %26 = dma.done [#allocation3], 64
    $region17: #{tpu_custom_call.1} parent=1 // pred_fallthru
      _
    %v27 = vld [vmem:[#allocation2] sm:$0xf]
    %v30 = vunpack.c.l.s4 1983009808
    %v31 = vunpack.c.0.s8 %v30
    %v32 = vlaneseq
    %v33 = vshrl.u32 %v32, 7
    %v34 = vsub.s32 %v31, %v33
    %v35 = vrot.slane %v27, %v34
    %v36 = vcombine.high %v35, %v35
    %vm39 = vcmask 1041408
    %v40 = vsel %vm39, %v35, 0.0
    %v41 = vsel %vm39, %v36, 0.0
    %v42 = vadd.f32 %v40, %v41
    %43 = vadd.xlane.f32.xlu0 %v42
    %v44 = vpop.xlane.xlu0 %43
    %v45 = vmul.f32 %v44, 0.00390625
    %v48 = vunpack.c.l.s4 269488144
    %v49 = vunpack.c.0.s8 %v48
    %v50 = vlaneseq
    %v51 = vshrl.u32 %v50, 7
    %v52 = vsub.s32 %v49, %v51
    %v53 = vrot.slane %v45, %v52
    %v55 = vsub.f32 %v27, %v53
    %v56 = vmul.f32 %v55, %v55
    %v59 = vunpack.c.l.s4 1983009808
    %v60 = vunpack.c.0.s8 %v59
    %v61 = vlaneseq
    %v62 = vshrl.u32 %v61, 7
    %v63 = vsub.s32 %v60, %v62
    %v64 = vrot.slane %v56, %v63
    %v65 = vcombine.high %v64, %v64
    %v68 = vsel %vm39, %v64, 0.0
    %v69 = vsel %vm39, %v65, 0.0
    %v70 = vadd.f32 %v68, %v69
    %71 = vadd.xlane.f32.xlu0 %v70
    %v72 = vpop.xlane.xlu0 %71
    %v73 = vmul.f32 %v72, 0.00390625
    %v74 = vadd.f32 %v73, 1e-05
    %v75 = vrsqrt.pop %v74
    %v76 = vld [vmem:[%s1] sm:$0x3]
    %v77 = vld [vmem:[%s2] sm:$0x3]
    %v80 = vunpack.c.l.s4 269488144
    %v81 = vunpack.c.0.s8 %v80
    %v82 = vlaneseq
    %v83 = vshrl.u32 %v82, 7
    %v84 = vsub.s32 %v81, %v83
    %v85 = vrot.slane %v75, %v84
    %v87 = vmul.f32 %v55, %v85
    %v89 = vlaneseq
    %v90 = vshrl.u32 %v89, 7
    %v91 = vsub.s32 0, %v90
    %v92 = vrot.slane %v76, %v91
    %v93 = vlaneseq
    %v94 = vshrl.u32 %v93, 7
    %v95 = vsub.s32 1, %v94
    %v96 = vrot.slane %v76, %v95
    %v97 = vcombine.low %v92, %v96
    %v99 = vunpack.c.l.s4 1983009808
    %v100 = vunpack.c.0.s8 %v99
    %v101 = vlaneseq
    %v102 = vshrl.u32 %v101, 7
    %v103 = vsub.s32 %v100, %v102
    %v104 = vrot.slane %v97, %v103
    %v106 = vmul.f32 %v87, %v104
    %v108 = vlaneseq
    %v109 = vshrl.u32 %v108, 7
    %v110 = vsub.s32 0, %v109
    %v111 = vrot.slane %v77, %v110
    %v112 = vlaneseq
    %v113 = vshrl.u32 %v112, 7
    %v114 = vsub.s32 1, %v113
    %v115 = vrot.slane %v77, %v114
    %v116 = vcombine.low %v111, %v115
    %v118 = vunpack.c.l.s4 1983009808
    %v119 = vunpack.c.0.s8 %v118
    %v120 = vlaneseq
    %v121 = vshrl.u32 %v120, 7
    %v122 = vsub.s32 %v119, %v121
    %v123 = vrot.slane %v116, %v122
    %v125 = vadd.f32 %v106, %v123
    %126 = vst [vmem:[#allocation5] sm:$0xf] %v125
    // Predicated region
    $region18: #{tpu_custom_call.1} parent=1 // pred_check
      _
    $region19: #{tpu_custom_call.1} parent=1 // pred_check_branch
      %128 = sbr.rel (0) target = $region21
    $region20: #{tpu_custom_call.1} parent=1 // pred_region
      %s130 = ssub.s32 64, 64
      %131 = vsyncadd [#allocation4], %s130
      %s133 = sshll.u32 [#allocation5], 4
      %s134 = int_to_ptr.vmem [resolvable:$true] %s133
      %136 = dma.vmem_to_hbm [thread:$0]  %s134, 64, %s3, [#allocation4]
    $region21: #{tpu_custom_call.1} parent=1 // pred_fallthru
      _
    // Predicated region
    $region22: #{tpu_custom_call.1} parent=1 // pred_check
      _
    $region23: #{tpu_custom_call.1} parent=1 // pred_check_branch
      %138 = sbr.rel (0) target = $region25
    $region24: #{tpu_custom_call.1} parent=1 // pred_region
      %139 = dma.done [#allocation4], 64
    $region25: #{tpu_custom_call.1} parent=1 // pred_fallthru
      _
    %140 = vsyncpa [#allocation3], 1
    %141 = vsyncpa [#allocation4], 1

</llo_original>
